<compile_context>
chip_gen: v5e
topology: v5e:2x2
jax: 0.10.0
libtpu: 0.0.40
codegen_flags: <defaults>
</compile_context>

<pallas_src>
import functools

import jax
import jax.numpy as jnp
from jax.experimental import pallas as pl
from jax.experimental.pallas import tpu as pltpu

ALPHA = 0.5
BETA = 0.5
SMOOTH = 1e-7


def _tversky_kernel(logits_ref, truth_ref, out_ref, *, n_classes, rows, tr,
                    tps, ch, acc_r, needs_mask):
    # logits_ref: (C, TR, 128) f32      truth_ref: (TR, 128) int
    # out_ref:    (CK*3, ACC_R, 128) int32  -- resident accumulator block,
    #             slot 3*j+0 = sum(p_k & t_k), 3*j+1 = sum(p_k), 3*j+2 = sum(t_k)
    t_idx = pl.program_id(2)
    s_idx = pl.program_id(1)

    @pl.when(t_idx == 0)
    def _init():
        out_ref[...] = jnp.zeros(out_ref.shape, out_ref.dtype)

    # Global row offset of this tile (UNclamped -- used only for masking).
    row_start = (s_idx * tps + t_idx) * tr

    if needs_mask:
        sub_iota = jax.lax.broadcasted_iota(jnp.int32, (ch, 128), 0)

    def fold(m):
        # (ch, 128) bool -> (acc_r, 128) int32 partial sum (VALU adds only).
        mi = m.astype(jnp.int32)
        if ch == acc_r:
            return mi
        tot = mi[0:acc_r, :]
        for r in range(1, ch // acc_r):
            tot = tot + mi[r * acc_r:(r + 1) * acc_r, :]
        return tot

    def chunk_body(c_idx, carry):
        off = pl.multiple_of(c_idx * ch, ch)
        truth = truth_ref[pl.ds(off, ch), :]

        # Channel argmax with first-index tie-break, without materializing
        # `pred`: keep only the "strictly better than running max" compares.
        run = logits_ref[0, pl.ds(off, ch), :]
        betters = []
        for k in range(1, n_classes):
            xk = logits_ref[k, pl.ds(off, ch), :]
            betters.append(xk > run)
            if k < n_classes - 1:
                run = jnp.maximum(run, xk)

        # pred == k  <=>  betters[k-1] and no later channel also beat the max.
        preds = [None] * (n_classes - 1)
        later = None
        for k in range(n_classes - 1, 0, -1):
            bk = betters[k - 1]
            if later is None:
                preds[k - 1] = bk
            else:
                preds[k - 1] = bk & ~later
            later = bk if later is None else (later | bk)

        if needs_mask:
            # Rows at/after `rows` (boundary garbage or overflow tiles) are
            # invalid: zero their contribution to every count.
            valid = sub_iota < (rows - row_start - off)
            truth = jnp.where(valid, truth, 0)
            preds = [p & valid for p in preds]

        for j in range(n_classes - 1):
            k = j + 1
            p_k = preds[j]
            t_k = truth == k
            out_ref[3 * j + 0] += fold(p_k & t_k)
            out_ref[3 * j + 1] += fold(p_k)
            out_ref[3 * j + 2] += fold(t_k)
        return carry

    jax.lax.fori_loop(0, tr // ch, chunk_body, 0)


@functools.partial(jax.jit, static_argnames=("tile_rows", "n_splits"))
def tversky_index(inputs, truth, tile_rows=1024, n_splits=2):
    """inputs: (N, C, H, W) float32 logits; truth: (N, H, W) integer labels."""
    n, c, h, w = inputs.shape
    ck = c - 1
    hw = h * w
    tile_rows = max(8, (int(tile_rows) // 8) * 8)
    n_splits = max(1, int(n_splits))

    # Labels: keep narrow native ints (uint8/int16/int32); down-cast 64-bit
    # ints; cast floats (torch does .long()).
    if jnp.issubdtype(truth.dtype, jnp.integer):
        if truth.dtype.itemsize > 4:
            truth = truth.astype(jnp.int32)
    else:
        truth = truth.astype(jnp.int32)

    rows = -(-hw // 128)                       # ceil(hw / 128)
    lane_pad = rows * 128 - hw

    logits = inputs.reshape(n, c, hw)          # free, contiguous reshape
    labels = truth.reshape(n, hw)
    if lane_pad:
        # Rare (hw % 128 != 0).  Zero pad is neutral for skip_first_class.
        # TODO(synk): handle the <128-pixel lane tail with a lane mask instead
        # of this (small but full-copy) pad.
        logits = jnp.pad(logits, ((0, 0), (0, 0), (0, lane_pad)))
        labels = jnp.pad(labels, ((0, 0), (0, lane_pad)))
    logits = logits.reshape(n, c, rows, 128)
    labels = labels.reshape(n, rows, 128)

    # Static tile geometry.  tr is a multiple of 8 (or the full tiny rows dim).
    if rows < 8:
        tr = rows
    else:
        tr = min(tile_rows, (rows // 8) * 8)
    total_tiles = -(-rows // tr)
    s = max(1, min(n_splits, total_tiles))     # splits for v7x's 2 TensorCores
    tps = -(-total_tiles // s)                 # cdiv: never collapse to 1 split
    ch = next((cand for cand in (32, 16, 8) if tr % cand == 0), tr)
    acc_r = 8 if ch % 8 == 0 else ch
    needs_mask = (rows % tr != 0) or (s * tps != total_tiles)

    kern = functools.partial(
        _tversky_kernel, n_classes=c, rows=rows, tr=tr, tps=tps,
        ch=ch, acc_r=acc_r, needs_mask=needs_mask)

    # Clamp tile index so overflow tiles (from the cdiv split) never DMA out
    # of bounds; their contribution is zeroed by the in-kernel mask.
    def logits_map(i, si, ti):
        return (i, 0, jnp.minimum(si * tps + ti, total_tiles - 1), 0)

    def labels_map(i, si, ti):
        return (i, jnp.minimum(si * tps + ti, total_tiles - 1), 0)

    def out_map(i, si, ti):
        return (i, si, 0, 0, 0)

    partials = pl.pallas_call(
        kern,
        out_shape=jax.ShapeDtypeStruct((n, s, ck * 3, acc_r, 128), jnp.int32),
        grid=(n, s, tps),
        in_specs=[
            pl.BlockSpec((pl.Squeezed(), c, tr, 128), logits_map),
            pl.BlockSpec((pl.Squeezed(), tr, 128), labels_map),
        ],
        out_specs=pl.BlockSpec(
            (pl.Squeezed(), pl.Squeezed(), ck * 3, acc_r, 128), out_map),
        compiler_params=pltpu.CompilerParams(
            dimension_semantics=("parallel", "parallel", "arbitrary")),
    )(logits, labels)

    # Tiny XLA epilogue: exact int32 combine (exact up to ~2^31 pixels per
    # class across the batch), then the 9-scalar Tversky math in f32.
    totals = jnp.sum(partials, axis=(0, 1, 3, 4)).astype(jnp.float32)
    totals = totals.reshape(ck, 3)
    tp, sp, st = totals[:, 0], totals[:, 1], totals[:, 2]
    fp = sp - tp
    fn = st - tp
    ti = tp / (tp + ALPHA * fp + BETA * fn + SMOOTH)
    return jnp.mean(ti)


def _reference(inputs, truth):
    # Pure-JAX mirror of the PyTorch forward (for verification).
    n_classes = inputs.shape[1]
    pred = jnp.argmax(jax.nn.softmax(inputs, axis=1), axis=1)
    eye = jnp.eye(n_classes, dtype=jnp.float32)
    p = jnp.transpose(eye[pred], (0, 3, 1, 2))[:, 1:]
    t = jnp.transpose(eye[truth], (0, 3, 1, 2))[:, 1:]
    inter = jnp.sum(p * t, axis=(0, 2, 3))
    fps = jnp.sum(p * (1 - t), axis=(0, 2, 3))
    fns = jnp.sum((1 - p) * t, axis=(0, 2, 3))
    return jnp.mean(inter / (inter + ALPHA * fps + BETA * fns + SMOOTH))


if __name__ == "__main__":
    key = jax.random.PRNGKey(0)

    # Case 1: small, tile-aligned (demo shape from the module).
    k1, k2, key = jax.random.split(key, 3)
    inputs = jax.random.normal(k1, (2, 4, 16, 16), dtype=jnp.float32)
    truth = jax.random.randint(k2, (2, 16, 16), 0, 4, dtype=jnp.int32)
    result = tversky_index(inputs, truth)
    jax.block_until_ready(result)
    ref = _reference(inputs, truth)
    assert jnp.allclose(result, ref, atol=1e-5, rtol=1e-5), (result, ref)

    # Case 2: non-aligned hw (exercises lane pad, partial tiles, split mask).
    k3, k4, _ = jax.random.split(key, 3)
    inputs2 = jax.random.normal(k3, (2, 4, 40, 40), dtype=jnp.float32)
    truth2 = jax.random.randint(k4, (2, 40, 40), 0, 4, dtype=jnp.int32)
    result2 = tversky_index(inputs2, truth2)
    jax.block_until_ready(result2)
    ref2 = _reference(inputs2, truth2)
    assert jnp.allclose(result2, ref2, atol=1e-5, rtol=1e-5), (result2, ref2)

    print("KERNEL_OK")
</pallas_src>

<mosaic_0001>
module attributes {stable_mosaic.version = 11 : i64} {
  func.func @_tversky_kernel(%arg0: i32, %arg1: i32, %arg2: i32, %arg3: memref<1x4x2x128xf32, #tpu.memory_space<vmem>>, %arg4: memref<1x2x128xi32, #tpu.memory_space<vmem>>, %arg5: memref<1x1x9x2x128xi32, #tpu.memory_space<vmem>>) attributes {dimension_semantics = [#tpu.dimension_semantics<parallel>, #tpu.dimension_semantics<parallel>, #tpu.dimension_semantics<arbitrary>], iteration_bounds = array<i64: 2, 1, 1>, scalar_prefetch = 0 : i64, scratch_operands = 0 : i64, tpu.core_type = #tpu.core_type<tc>, window_params = [{transform_indices = @transform_0, window_bounds = array<i64: 1, 4, 2, 128>}, {transform_indices = @transform_1, window_bounds = array<i64: 1, 2, 128>}, {transform_indices = @transform_2, window_bounds = array<i64: 1, 1, 9, 2, 128>}]} {
    %c0_i32 = arith.constant 0 : i32
    %0 = arith.cmpi eq, %arg2, %c0_i32 : i32
    %1 = arith.extui %0 : i1 to i32
    %c0_i32_0 = arith.constant 0 : i32
    %2 = arith.cmpi ne, %1, %c0_i32_0 : i32
    scf.if %2 {
      %c0_i32_100 = arith.constant 0 : i32
      %102 = vector.broadcast %c0_i32_100 : i32 to vector<9x2x128xi32>
      %c0_101 = arith.constant 0 : index
      %c0_102 = arith.constant 0 : index
      %c0_103 = arith.constant 0 : index
      %c0_104 = arith.constant 0 : index
      %c0_105 = arith.constant 0 : index
      %103 = vector.load %arg5[%c0_101, %c0_102, %c0_103, %c0_104, %c0_105] : memref<1x1x9x2x128xi32, #tpu.memory_space<vmem>>, vector<1x1x9x2x128xi32>
      %104 = vector.shape_cast %103 : vector<1x1x9x2x128xi32> to vector<9x2x128xi32>
      %105 = vector.shape_cast %102 : vector<9x2x128xi32> to vector<1x1x9x2x128xi32>
      tpu.vector_store %arg5[%c0_101, %c0_102, %c0_103, %c0_104, %c0_105], %105 {strides = array<i32>} : memref<1x1x9x2x128xi32, #tpu.memory_space<vmem>>, vector<1x1x9x2x128xi32>,
    } else {
    }
    %c0_i32_1 = arith.constant 0 : i32
    %c2_i32 = arith.constant 2 : i32
    %3 = arith.muli %c0_i32_1, %c2_i32 : i32
    %4 = tpu.assume_multiple %3, 2 : i32
    %c0 = arith.constant 0 : index
    %5 = arith.index_cast %4 : i32 to index
    %c0_2 = arith.constant 0 : index
    %6 = vector.load %arg4[%c0, %5, %c0_2] : memref<1x2x128xi32, #tpu.memory_space<vmem>>, vector<1x2x128xi32>
    %7 = vector.shape_cast %6 : vector<1x2x128xi32> to vector<2x128xi32>
    %c0_3 = arith.constant 0 : index
    %c0_4 = arith.constant 0 : index
    %8 = arith.index_cast %4 : i32 to index
    %c0_5 = arith.constant 0 : index
    %9 = vector.load %arg3[%c0_3, %c0_4, %8, %c0_5] : memref<1x4x2x128xf32, #tpu.memory_space<vmem>>, vector<1x1x2x128xf32>
    %10 = vector.shape_cast %9 : vector<1x1x2x128xf32> to vector<2x128xf32>
    %c0_6 = arith.constant 0 : index
    %c1 = arith.constant 1 : index
    %11 = arith.index_cast %4 : i32 to index
    %c0_7 = arith.constant 0 : index
    %12 = vector.load %arg3[%c0_6, %c1, %11, %c0_7] : memref<1x4x2x128xf32, #tpu.memory_space<vmem>>, vector<1x1x2x128xf32>
    %13 = vector.shape_cast %12 : vector<1x1x2x128xf32> to vector<2x128xf32>
    %14 = arith.cmpf ogt, %13, %10 : vector<2x128xf32>
    %15 = arith.maximumf %10, %13 : vector<2x128xf32>
    %c0_8 = arith.constant 0 : index
    %c2 = arith.constant 2 : index
    %16 = arith.index_cast %4 : i32 to index
    %c0_9 = arith.constant 0 : index
    %17 = vector.load %arg3[%c0_8, %c2, %16, %c0_9] : memref<1x4x2x128xf32, #tpu.memory_space<vmem>>, vector<1x1x2x128xf32>
    %18 = vector.shape_cast %17 : vector<1x1x2x128xf32> to vector<2x128xf32>
    %19 = arith.cmpf ogt, %18, %15 : vector<2x128xf32>
    %20 = arith.maximumf %15, %18 : vector<2x128xf32>
    %c0_10 = arith.constant 0 : index
    %c3 = arith.constant 3 : index
    %21 = arith.index_cast %4 : i32 to index
    %c0_11 = arith.constant 0 : index
    %22 = vector.load %arg3[%c0_10, %c3, %21, %c0_11] : memref<1x4x2x128xf32, #tpu.memory_space<vmem>>, vector<1x1x2x128xf32>
    %23 = vector.shape_cast %22 : vector<1x1x2x128xf32> to vector<2x128xf32>
    %24 = arith.cmpf ogt, %23, %20 : vector<2x128xf32>
    %cst = arith.constant dense<true> : vector<2x128xi1>
    %25 = arith.xori %24, %cst : vector<2x128xi1>
    %26 = arith.andi %19, %25 : vector<2x128xi1>
    %27 = arith.ori %24, %19 : vector<2x128xi1>
    %cst_12 = arith.constant dense<true> : vector<2x128xi1>
    %28 = arith.xori %27, %cst_12 : vector<2x128xi1>
    %29 = arith.andi %14, %28 : vector<2x128xi1>
    %c1_i32 = arith.constant 1 : i32
    %30 = vector.broadcast %c1_i32 : i32 to vector<2x128xi32>
    %31 = arith.cmpi eq, %7, %30 : vector<2x128xi32>
    %c0_13 = arith.constant 0 : index
    %c0_14 = arith.constant 0 : index
    %c0_15 = arith.constant 0 : index
    %c0_16 = arith.constant 0 : index
    %c0_17 = arith.constant 0 : index
    %32 = vector.load %arg5[%c0_13, %c0_14, %c0_15, %c0_16, %c0_17] : memref<1x1x9x2x128xi32, #tpu.memory_space<vmem>>, vector<1x1x1x2x128xi32>
    %33 = vector.shape_cast %32 : vector<1x1x1x2x128xi32> to vector<2x128xi32>
    %34 = arith.andi %29, %31 : vector<2x128xi1>
    %35 = arith.extui %34 : vector<2x128xi1> to vector<2x128xi32>
    %36 = arith.addi %33, %35 : vector<2x128xi32>
    %c0_18 = arith.constant 0 : index
    %c0_19 = arith.constant 0 : index
    %c0_20 = arith.constant 0 : index
    %c0_21 = arith.constant 0 : index
    %c0_22 = arith.constant 0 : index
    %37 = vector.load %arg5[%c0_18, %c0_19, %c0_20, %c0_21, %c0_22] : memref<1x1x9x2x128xi32, #tpu.memory_space<vmem>>, vector<1x1x1x2x128xi32>
    %38 = vector.shape_cast %37 : vector<1x1x1x2x128xi32> to vector<2x128xi32>
    %39 = vector.shape_cast %36 : vector<2x128xi32> to vector<1x1x1x2x128xi32>
    tpu.vector_store %arg5[%c0_18, %c0_19, %c0_20, %c0_21, %c0_22], %39 {strides = array<i32>} : memref<1x1x9x2x128xi32, #tpu.memory_space<vmem>>, vector<1x1x1x2x128xi32>,
    %c0_23 = arith.constant 0 : index
    %c0_24 = arith.constant 0 : index
    %c1_25 = arith.constant 1 : index
    %c0_26 = arith.constant 0 : index
    %c0_27 = arith.constant 0 : index
    %40 = vector.load %arg5[%c0_23, %c0_24, %c1_25, %c0_26, %c0_27] : memref<1x1x9x2x128xi32, #tpu.memory_space<vmem>>, vector<1x1x1x2x128xi32>
    %41 = vector.shape_cast %40 : vector<1x1x1x2x128xi32> to vector<2x128xi32>
    %42 = arith.extui %29 : vector<2x128xi1> to vector<2x128xi32>
    %43 = arith.addi %41, %42 : vector<2x128xi32>
    %c0_28 = arith.constant 0 : index
    %c0_29 = arith.constant 0 : index
    %c1_30 = arith.constant 1 : index
    %c0_31 = arith.constant 0 : index
    %c0_32 = arith.constant 0 : index
    %44 = vector.load %arg5[%c0_28, %c0_29, %c1_30, %c0_31, %c0_32] : memref<1x1x9x2x128xi32, #tpu.memory_space<vmem>>, vector<1x1x1x2x128xi32>
    %45 = vector.shape_cast %44 : vector<1x1x1x2x128xi32> to vector<2x128xi32>
    %46 = vector.shape_cast %43 : vector<2x128xi32> to vector<1x1x1x2x128xi32>
    tpu.vector_store %arg5[%c0_28, %c0_29, %c1_30, %c0_31, %c0_32], %46 {strides = array<i32>} : memref<1x1x9x2x128xi32, #tpu.memory_space<vmem>>, vector<1x1x1x2x128xi32>,
    %c0_33 = arith.constant 0 : index
    %c0_34 = arith.constant 0 : index
    %c2_35 = arith.constant 2 : index
    %c0_36 = arith.constant 0 : index
    %c0_37 = arith.constant 0 : index
    %47 = vector.load %arg5[%c0_33, %c0_34, %c2_35, %c0_36, %c0_37] : memref<1x1x9x2x128xi32, #tpu.memory_space<vmem>>, vector<1x1x1x2x128xi32>
    %48 = vector.shape_cast %47 : vector<1x1x1x2x128xi32> to vector<2x128xi32>
    %49 = arith.extui %31 : vector<2x128xi1> to vector<2x128xi32>
    %50 = arith.addi %48, %49 : vector<2x128xi32>
    %c0_38 = arith.constant 0 : index
    %c0_39 = arith.constant 0 : index
    %c2_40 = arith.constant 2 : index
    %c0_41 = arith.constant 0 : index
    %c0_42 = arith.constant 0 : index
    %51 = vector.load %arg5[%c0_38, %c0_39, %c2_40, %c0_41, %c0_42] : memref<1x1x9x2x128xi32, #tpu.memory_space<vmem>>, vector<1x1x1x2x128xi32>
    %52 = vector.shape_cast %51 : vector<1x1x1x2x128xi32> to vector<2x128xi32>
    %53 = vector.shape_cast %50 : vector<2x128xi32> to vector<1x1x1x2x128xi32>
    tpu.vector_store %arg5[%c0_38, %c0_39, %c2_40, %c0_41, %c0_42], %53 {strides = array<i32>} : memref<1x1x9x2x128xi32, #tpu.memory_space<vmem>>, vector<1x1x1x2x128xi32>,
    %c2_i32_43 = arith.constant 2 : i32
    %54 = vector.broadcast %c2_i32_43 : i32 to vector<2x128xi32>
    %55 = arith.cmpi eq, %7, %54 : vector<2x128xi32>
    %c0_44 = arith.constant 0 : index
    %c0_45 = arith.constant 0 : index
    %c3_46 = arith.constant 3 : index
    %c0_47 = arith.constant 0 : index
    %c0_48 = arith.constant 0 : index
    %56 = vector.load %arg5[%c0_44, %c0_45, %c3_46, %c0_47, %c0_48] : memref<1x1x9x2x128xi32, #tpu.memory_space<vmem>>, vector<1x1x1x2x128xi32>
    %57 = vector.shape_cast %56 : vector<1x1x1x2x128xi32> to vector<2x128xi32>
    %58 = arith.andi %26, %55 : vector<2x128xi1>
    %59 = arith.extui %58 : vector<2x128xi1> to vector<2x128xi32>
    %60 = arith.addi %57, %59 : vector<2x128xi32>
    %c0_49 = arith.constant 0 : index
    %c0_50 = arith.constant 0 : index
    %c3_51 = arith.constant 3 : index
    %c0_52 = arith.constant 0 : index
    %c0_53 = arith.constant 0 : index
    %61 = vector.load %arg5[%c0_49, %c0_50, %c3_51, %c0_52, %c0_53] : memref<1x1x9x2x128xi32, #tpu.memory_space<vmem>>, vector<1x1x1x2x128xi32>
    %62 = vector.shape_cast %61 : vector<1x1x1x2x128xi32> to vector<2x128xi32>
    %63 = vector.shape_cast %60 : vector<2x128xi32> to vector<1x1x1x2x128xi32>
    tpu.vector_store %arg5[%c0_49, %c0_50, %c3_51, %c0_52, %c0_53], %63 {strides = array<i32>} : memref<1x1x9x2x128xi32, #tpu.memory_space<vmem>>, vector<1x1x1x2x128xi32>,
    %c0_54 = arith.constant 0 : index
    %c0_55 = arith.constant 0 : index
    %c4 = arith.constant 4 : index
    %c0_56 = arith.constant 0 : index
    %c0_57 = arith.constant 0 : index
    %64 = vector.load %arg5[%c0_54, %c0_55, %c4, %c0_56, %c0_57] : memref<1x1x9x2x128xi32, #tpu.memory_space<vmem>>, vector<1x1x1x2x128xi32>
    %65 = vector.shape_cast %64 : vector<1x1x1x2x128xi32> to vector<2x128xi32>
    %66 = arith.extui %26 : vector<2x128xi1> to vector<2x128xi32>
    %67 = arith.addi %65, %66 : vector<2x128xi32>
    %c0_58 = arith.constant 0 : index
    %c0_59 = arith.constant 0 : index
    %c4_60 = arith.constant 4 : index
    %c0_61 = arith.constant 0 : index
    %c0_62 = arith.constant 0 : index
    %68 = vector.load %arg5[%c0_58, %c0_59, %c4_60, %c0_61, %c0_62] : memref<1x1x9x2x128xi32, #tpu.memory_space<vmem>>, vector<1x1x1x2x128xi32>
    %69 = vector.shape_cast %68 : vector<1x1x1x2x128xi32> to vector<2x128xi32>
    %70 = vector.shape_cast %67 : vector<2x128xi32> to vector<1x1x1x2x128xi32>
    tpu.vector_store %arg5[%c0_58, %c0_59, %c4_60, %c0_61, %c0_62], %70 {strides = array<i32>} : memref<1x1x9x2x128xi32, #tpu.memory_space<vmem>>, vector<1x1x1x2x128xi32>,
    %c0_63 = arith.constant 0 : index
    %c0_64 = arith.constant 0 : index
    %c5 = arith.constant 5 : index
    %c0_65 = arith.constant 0 : index
    %c0_66 = arith.constant 0 : index
    %71 = vector.load %arg5[%c0_63, %c0_64, %c5, %c0_65, %c0_66] : memref<1x1x9x2x128xi32, #tpu.memory_space<vmem>>, vector<1x1x1x2x128xi32>
    %72 = vector.shape_cast %71 : vector<1x1x1x2x128xi32> to vector<2x128xi32>
    %73 = arith.extui %55 : vector<2x128xi1> to vector<2x128xi32>
    %74 = arith.addi %72, %73 : vector<2x128xi32>
    %c0_67 = arith.constant 0 : index
    %c0_68 = arith.constant 0 : index
    %c5_69 = arith.constant 5 : index
    %c0_70 = arith.constant 0 : index
    %c0_71 = arith.constant 0 : index
    %75 = vector.load %arg5[%c0_67, %c0_68, %c5_69, %c0_70, %c0_71] : memref<1x1x9x2x128xi32, #tpu.memory_space<vmem>>, vector<1x1x1x2x128xi32>
    %76 = vector.shape_cast %75 : vector<1x1x1x2x128xi32> to vector<2x128xi32>
    %77 = vector.shape_cast %74 : vector<2x128xi32> to vector<1x1x1x2x128xi32>
    tpu.vector_store %arg5[%c0_67, %c0_68, %c5_69, %c0_70, %c0_71], %77 {strides = array<i32>} : memref<1x1x9x2x128xi32, #tpu.memory_space<vmem>>, vector<1x1x1x2x128xi32>,
    %c3_i32 = arith.constant 3 : i32
    %78 = vector.broadcast %c3_i32 : i32 to vector<2x128xi32>
    %79 = arith.cmpi eq, %7, %78 : vector<2x128xi32>
    %c0_72 = arith.constant 0 : index
    %c0_73 = arith.constant 0 : index
    %c6 = arith.constant 6 : index
    %c0_74 = arith.constant 0 : index
    %c0_75 = arith.constant 0 : index
    %80 = vector.load %arg5[%c0_72, %c0_73, %c6, %c0_74, %c0_75] : memref<1x1x9x2x128xi32, #tpu.memory_space<vmem>>, vector<1x1x1x2x128xi32>
    %81 = vector.shape_cast %80 : vector<1x1x1x2x128xi32> to vector<2x128xi32>
    %82 = arith.andi %24, %79 : vector<2x128xi1>
    %83 = arith.extui %82 : vector<2x128xi1> to vector<2x128xi32>
    %84 = arith.addi %81, %83 : vector<2x128xi32>
    %c0_76 = arith.constant 0 : index
    %c0_77 = arith.constant 0 : index
    %c6_78 = arith.constant 6 : index
    %c0_79 = arith.constant 0 : index
    %c0_80 = arith.constant 0 : index
    %85 = vector.load %arg5[%c0_76, %c0_77, %c6_78, %c0_79, %c0_80] : memref<1x1x9x2x128xi32, #tpu.memory_space<vmem>>, vector<1x1x1x2x128xi32>
    %86 = vector.shape_cast %85 : vector<1x1x1x2x128xi32> to vector<2x128xi32>
    %87 = vector.shape_cast %84 : vector<2x128xi32> to vector<1x1x1x2x128xi32>
    tpu.vector_store %arg5[%c0_76, %c0_77, %c6_78, %c0_79, %c0_80], %87 {strides = array<i32>} : memref<1x1x9x2x128xi32, #tpu.memory_space<vmem>>, vector<1x1x1x2x128xi32>,
    %c0_81 = arith.constant 0 : index
    %c0_82 = arith.constant 0 : index
    %c7 = arith.constant 7 : index
    %c0_83 = arith.constant 0 : index
    %c0_84 = arith.constant 0 : index
    %88 = vector.load %arg5[%c0_81, %c0_82, %c7, %c0_83, %c0_84] : memref<1x1x9x2x128xi32, #tpu.memory_space<vmem>>, vector<1x1x1x2x128xi32>
    %89 = vector.shape_cast %88 : vector<1x1x1x2x128xi32> to vector<2x128xi32>
    %90 = arith.extui %24 : vector<2x128xi1> to vector<2x128xi32>
    %91 = arith.addi %89, %90 : vector<2x128xi32>
    %c0_85 = arith.constant 0 : index
    %c0_86 = arith.constant 0 : index
    %c7_87 = arith.constant 7 : index
    %c0_88 = arith.constant 0 : index
    %c0_89 = arith.constant 0 : index
    %92 = vector.load %arg5[%c0_85, %c0_86, %c7_87, %c0_88, %c0_89] : memref<1x1x9x2x128xi32, #tpu.memory_space<vmem>>, vector<1x1x1x2x128xi32>
    %93 = vector.shape_cast %92 : vector<1x1x1x2x128xi32> to vector<2x128xi32>
    %94 = vector.shape_cast %91 : vector<2x128xi32> to vector<1x1x1x2x128xi32>
    tpu.vector_store %arg5[%c0_85, %c0_86, %c7_87, %c0_88, %c0_89], %94 {strides = array<i32>} : memref<1x1x9x2x128xi32, #tpu.memory_space<vmem>>, vector<1x1x1x2x128xi32>,
    %c0_90 = arith.constant 0 : index
    %c0_91 = arith.constant 0 : index
    %c8 = arith.constant 8 : index
    %c0_92 = arith.constant 0 : index
    %c0_93 = arith.constant 0 : index
    %95 = vector.load %arg5[%c0_90, %c0_91, %c8, %c0_92, %c0_93] : memref<1x1x9x2x128xi32, #tpu.memory_space<vmem>>, vector<1x1x1x2x128xi32>
    %96 = vector.shape_cast %95 : vector<1x1x1x2x128xi32> to vector<2x128xi32>
    %97 = arith.extui %79 : vector<2x128xi1> to vector<2x128xi32>
    %98 = arith.addi %96, %97 : vector<2x128xi32>
    %c0_94 = arith.constant 0 : index
    %c0_95 = arith.constant 0 : index
    %c8_96 = arith.constant 8 : index
    %c0_97 = arith.constant 0 : index
    %c0_98 = arith.constant 0 : index
    %99 = vector.load %arg5[%c0_94, %c0_95, %c8_96, %c0_97, %c0_98] : memref<1x1x9x2x128xi32, #tpu.memory_space<vmem>>, vector<1x1x1x2x128xi32>
    %100 = vector.shape_cast %99 : vector<1x1x1x2x128xi32> to vector<2x128xi32>
    %101 = vector.shape_cast %98 : vector<2x128xi32> to vector<1x1x1x2x128xi32>
    tpu.vector_store %arg5[%c0_94, %c0_95, %c8_96, %c0_97, %c0_98], %101 {strides = array<i32>} : memref<1x1x9x2x128xi32, #tpu.memory_space<vmem>>, vector<1x1x1x2x128xi32>,
    %c1_i32_99 = arith.constant 1 : i32
    return
  }
  func.func @transform_0(%arg0: i32, %arg1: i32, %arg2: i32) -> (i32, i32, i32, i32) {
    %c1_i32 = arith.constant 1 : i32
    %0 = arith.muli %arg1, %c1_i32 : i32
    %1 = arith.addi %0, %arg2 : i32
    %c0_i32 = arith.constant 0 : i32
    %2 = arith.minsi %1, %c0_i32 : i32
    %c0_i32_0 = arith.constant 0 : i32
    %c0_i32_1 = arith.constant 0 : i32
    %c0_i32_2 = arith.constant 0 : i32
    return %arg0, %c0_i32_0, %2, %c0_i32_1 : i32, i32, i32, i32
  }
  func.func @transform_1(%arg0: i32, %arg1: i32, %arg2: i32) -> (i32, i32, i32) {
    %c1_i32 = arith.constant 1 : i32
    %0 = arith.muli %arg1, %c1_i32 : i32
    %1 = arith.addi %0, %arg2 : i32
    %c0_i32 = arith.constant 0 : i32
    %2 = arith.minsi %1, %c0_i32 : i32
    %c0_i32_0 = arith.constant 0 : i32
    %c0_i32_1 = arith.constant 0 : i32
    return %arg0, %2, %c0_i32_0 : i32, i32, i32
  }
  func.func @transform_2(%arg0: i32, %arg1: i32, %arg2: i32) -> (i32, i32, i32, i32, i32) {
    %c0_i32 = arith.constant 0 : i32
    %c0_i32_0 = arith.constant 0 : i32
    %c0_i32_1 = arith.constant 0 : i32
    %c0_i32_2 = arith.constant 0 : i32
    return %arg0, %arg1, %c0_i32, %c0_i32_0, %c0_i32_1 : i32, i32, i32, i32, i32
  }
}

</mosaic_0001>

<llo_original>
// kernel: tversky_index.1
$region0: #{tversky_index.1}
  #allocation0 [shape = 'u32[]', space=smem, size = 0x4, offset = 0x4, fixed_abs, tag = 'smem constant byte address 0x4 - core index']
  #allocation1 [shape = 'u32[72,128]{1,0:T(1,128)}', space=vmem, size = 0x9000, scoped, tag = 'internal scratch']
  %s0 = inlined_call_operand.vmem [shape: f32[2,4,2,128], index: 0, kind: input, shape index: {}]
  %s1 = inlined_call_operand.vmem [shape: s32[2,2,128], index: 1, kind: input, shape index: {}]
  %s2 = inlined_call_operand.vmem [shape: s32[2,1,9,2,128], index: 2, kind: output, shape index: {}]
  %s3 = sld [smem:[#allocation0]]
  $region45: #{tversky_index.1} parent=0
    _
  %s5 = ssub.s32 1, %s3
  %s6 = scalar_select 0, %s5, %s3
  loop: start=0, step=1, limit=4
  $region2: #{tversky_index.1} parent=0 // loop_pre_header
    _
  $region3: #{tversky_index.1} parent=0 // loop_header
    %s8 = sphi 0, %s12
    %p9 = scmp.ge.s32.totalorder %s8, 4
    %s15 = sphi 0, %s34
    %s16 = sphi 0, %s30
    %s17 = sphi 0, %s26
    %s18 = sphi 0, %s15
    %s19 = sphi 0, %s16
    %s20 = sphi 0, %s17
    %s21 = sphi 0, %s18
    %s22 = sphi 0, %s19
    %s23 = sphi 0, %s20
    %s45 = sphi 0, %s47
    %s48 = sphi 0, %s45
    %s49 = sphi 0, %s48
    %s65 = sphi 0, %s49
    %s79 = sphi 0, %s81
    %s82 = sphi 0, %s79
    %s83 = sphi 0, %s82
    %s99 = sphi 0, %s83
    %s107 = sphi 0, %s109
    %s110 = sphi 0, %s107
    %s111 = sphi 0, %s110
    %s127 = sphi 0, %s111
  $region4: #{tversky_index.1} parent=0 // loop_header_branch
    %11 = sbr.rel (%p9) target = $region8
  $region5: #{tversky_index.1} parent=0 // loop_body
    %s13 = ssub.s32 %s8, 1
    %s14 = ssub.s32 %s8, 2
    %s24 = sadd.s32 1, %s17
    %p25 = scmp.ge.s32.totalorder %s24, 1
    %s26 = scalar_select %p25, 0, %s24
    %s27 = sadd.s32 1, %s16
    %s28 = scalar_select %p25, %s27, %s16
    %p29 = scmp.ge.s32.totalorder %s28, 1
    %s30 = scalar_select %p29, 0, %s28
    %s31 = sadd.s32 1, %s15
    %s32 = scalar_select %p29, %s31, %s15
    %p33 = scmp.ge.s32.totalorder %s32, 2
    %s34 = scalar_select %p33, 0, %s32
    %s35 = sadd.s32 %s16, %s17
    %p36 = scmp.lt.s32.totalorder %s35, 0
    %s37 = scalar_select %p36, %s35, 0
    %s38 = sadd.s32 %s30, %s26
    %p39 = scmp.lt.s32.totalorder %s38, 0
    %s40 = scalar_select %p39, %s38, 0
    %s41 = ssub.s32 %s15, %s34
    %s42 = ssub.s32 %s37, %s40
    %s43 = sor.u32 %s41, %s42
    %p44 = scmp.eq.s32.totalorder %s43, 0
    %s46 = sadd.s32 %s45, 1
    %s47 = scalar_select %p44, %s45, %s46
    %p50 = pneg %p44
    %p51 = scmp.eq.s32.totalorder %s8, 1
    %p52 = por %p50, %p51
    %p53 = scmp.ne.s32.totalorder %s45, %s48
    %p54 = scmp.eq.s32.totalorder %s8, 0
    %p55 = por %p53, %p54
    %p56 = scmp.ne.s32.totalorder %s45, %s48
    %p57 = scmp.eq.s32.totalorder %s13, 1
    %p58 = por %p56, %p57
    %p59 = scmp.ne.s32.totalorder %s48, %s49
    %p60 = scmp.eq.s32.totalorder %s13, 0
    %p61 = por %p59, %p60
    %p62 = scmp.ne.s32.totalorder %s48, %s49
    %p63 = scmp.eq.s32.totalorder %s14, 1
    %p64 = por %p62, %p63
    %p66 = scmp.ne.s32.totalorder %s49, %s65
    %p67 = scmp.eq.s32.totalorder %s14, 0
    %p68 = por %p66, %p67
    %s69 = sadd.s32 %s16, %s17
    %p70 = scmp.lt.s32.totalorder %s69, 0
    %s71 = scalar_select %p70, %s69, 0
    %s72 = sadd.s32 %s30, %s26
    %p73 = scmp.lt.s32.totalorder %s72, 0
    %s74 = scalar_select %p73, %s72, 0
    %s75 = ssub.s32 %s15, %s34
    %s76 = ssub.s32 %s71, %s74
    %s77 = sor.u32 %s75, %s76
    %p78 = scmp.eq.s32.totalorder %s77, 0
    %s80 = sadd.s32 %s79, 1
    %s81 = scalar_select %p78, %s79, %s80
    %p84 = pneg %p78
    %p85 = scmp.eq.s32.totalorder %s8, 1
    %p86 = por %p84, %p85
    %p87 = scmp.ne.s32.totalorder %s79, %s82
    %p88 = scmp.eq.s32.totalorder %s8, 0
    %p89 = por %p87, %p88
    %p90 = scmp.ne.s32.totalorder %s79, %s82
    %p91 = scmp.eq.s32.totalorder %s13, 1
    %p92 = por %p90, %p91
    %p93 = scmp.ne.s32.totalorder %s82, %s83
    %p94 = scmp.eq.s32.totalorder %s13, 0
    %p95 = por %p93, %p94
    %p96 = scmp.ne.s32.totalorder %s82, %s83
    %p97 = scmp.eq.s32.totalorder %s14, 1
    %p98 = por %p96, %p97
    %p100 = scmp.ne.s32.totalorder %s83, %s99
    %p101 = scmp.eq.s32.totalorder %s14, 0
    %p102 = por %p100, %p101
    %s103 = ssub.s32 %s15, %s34
    %s104 = ssub.s32 %s16, %s30
    %s105 = sor.u32 %s103, %s104
    %p106 = scmp.eq.s32.totalorder %s105, 0
    %s108 = sadd.s32 %s107, 1
    %s109 = scalar_select %p106, %s107, %s108
    %p112 = pneg %p106
    %p113 = scmp.eq.s32.totalorder %s8, 1
    %p114 = por %p112, %p113
    %p115 = scmp.ne.s32.totalorder %s107, %s110
    %p116 = scmp.eq.s32.totalorder %s8, 0
    %p117 = por %p115, %p116
    %p118 = scmp.ne.s32.totalorder %s107, %s110
    %p119 = scmp.eq.s32.totalorder %s13, 1
    %p120 = por %p118, %p119
    %p121 = scmp.ne.s32.totalorder %s110, %s111
    %p122 = scmp.eq.s32.totalorder %s13, 0
    %p123 = por %p121, %p122
    %p124 = scmp.ne.s32.totalorder %s110, %s111
    %p125 = scmp.eq.s32.totalorder %s14, 1
    %p126 = por %p124, %p125
    %p128 = scmp.ne.s32.totalorder %s111, %s127
    %p129 = scmp.eq.s32.totalorder %s14, 0
    %p130 = por %p128, %p129
    %p131 = scmp.le.s32.totalorder 1, %s8
    %p132 = scmp.lt.s32.totalorder %s8, 3
    %p133 = pnand %p131, %p132
    %p134 = pneg %p133
    // Predicated region
    $region9: #{tversky_index.1} parent=5 // pred_check
      _
    $region10: #{tversky_index.1} parent=5 // pred_check_branch
      %136 = sbr.rel (%p133) target = $region12
    $region11: #{tversky_index.1} parent=5 // pred_region
      %s137 = ssub.s32 %s8, 1
    $region12: #{tversky_index.1} parent=5 // pred_fallthru
      _
    %p138 = scmp.lt.s32.totalorder %s8, 2
    // Predicated region
    $region13: #{tversky_index.1} parent=5 // pred_check
      %p139 = pneg %p138
    $region14: #{tversky_index.1} parent=5 // pred_check_branch
      %141 = sbr.rel (%p139) target = $region16
    $region15: #{tversky_index.1} parent=5 // pred_region
      // Predicated region
      $region17: #{tversky_index.1} parent=15 // pred_check
        %p142 = pneg %p55
      $region18: #{tversky_index.1} parent=15 // pred_check_branch
        %144 = sbr.rel (%p142) target = $region20
      $region19: #{tversky_index.1} parent=15 // pred_region
        %s145 = sadd.s32 %s16, %s17
        %p146 = scmp.lt.s32.totalorder %s145, 0
        %s147 = scalar_select %p146, %s145, 0
        %p148 = scmp.lt.s32.totalorder %s15, 1
        %s149 = scalar_select %p148, %s15, 1
        %p150 = scmp.lt.s32.totalorder %s147, 0
        %s151 = scalar_select %p150, %s147, 0
        %s152 = smul.addr %s149, 4
        %s153 = sadd.s32 %s151, %s152
        %s154 = smul.addr %s153, 2
        %s155 = scalar_lea.vmem %s0, %s154
        %s156 = sadd.s32 %s16, %s17
        %p157 = scmp.lt.s32.totalorder %s156, 0
        %s158 = scalar_select %p157, %s156, 0
      $region20: #{tversky_index.1} parent=15 // pred_fallthru
        _
      // Predicated region
      $region21: #{tversky_index.1} parent=15 // pred_check
        %p159 = pneg %p89
      $region22: #{tversky_index.1} parent=15 // pred_check_branch
        %161 = sbr.rel (%p159) target = $region24
      $region23: #{tversky_index.1} parent=15 // pred_region
        %s162 = sadd.s32 %s16, %s17
        %p163 = scmp.lt.s32.totalorder %s162, 0
        %s164 = scalar_select %p163, %s162, 0
        %p165 = scmp.lt.s32.totalorder %s15, 1
        %s166 = scalar_select %p165, %s15, 1
        %p167 = scmp.lt.s32.totalorder %s164, 0
        %s168 = scalar_select %p167, %s164, 0
        %s169 = sadd.s32 %s168, %s166
        %s170 = smul.addr %s169, 2
        %s171 = scalar_lea.vmem %s1, %s170
        %s172 = sadd.s32 %s16, %s17
        %p173 = scmp.lt.s32.totalorder %s172, 0
        %s174 = scalar_select %p173, %s172, 0
      $region24: #{tversky_index.1} parent=15 // pred_fallthru
        _
    $region16: #{tversky_index.1} parent=5 // pred_fallthru
      _
    %p175 = scmp.le.s32.totalorder 1, %s8
    %p176 = scmp.lt.s32.totalorder %s8, 3
    %p177 = pnand %p175, %p176
    %p178 = pneg %p177
    // Predicated region
    $region25: #{tversky_index.1} parent=5 // pred_check
      _
    $region26: #{tversky_index.1} parent=5 // pred_check_branch
      %180 = sbr.rel (%p177) target = $region28
    $region27: #{tversky_index.1} parent=5 // pred_region
      %s181 = ssub.s32 %s8, 1
      %s182 = sadd.s32 %s19, %s20
      %p183 = scmp.lt.s32.totalorder %s182, 0
      %s184 = scalar_select %p183, %s182, 0
      %p185 = scmp.lt.s32.totalorder %s18, 1
      %s186 = scalar_select %p185, %s18, 1
      %p187 = scmp.lt.s32.totalorder %s184, 0
      %s188 = scalar_select %p187, %s184, 0
      %s189 = smul.addr %s186, 4
      %s190 = sadd.s32 %s188, %s189
      %s191 = smul.addr %s190, 2
      %s192 = scalar_lea.vmem %s0, %s191
      %p193 = pneg %p61
      %p194 = pneg %p58
      %s195 = sadd.s32 %s19, %s20
      %p196 = scmp.lt.s32.totalorder %s195, 0
      %s197 = scalar_select %p196, %s195, 0
      %p198 = scmp.lt.s32.totalorder %s18, 1
      %s199 = scalar_select %p198, %s18, 1
      %p200 = scmp.lt.s32.totalorder %s197, 0
      %s201 = scalar_select %p200, %s197, 0
      %s202 = sadd.s32 %s201, %s199
      %s203 = smul.addr %s202, 2
      %s204 = scalar_lea.vmem %s1, %s203
      %p205 = pneg %p95
      %p206 = pneg %p92
      %p207 = pneg %p123
      %p208 = pneg %p120
      %p209 = scmp.lt.s32.totalorder %s18, 1
      %s210 = scalar_select %p209, %s18, 1
      %p211 = scmp.lt.s32.totalorder %s19, 0
      %s212 = scalar_select %p211, %s19, 0
      %s213 = smul.addr %s212, 9
      %s214 = smul.addr %s210, 9
      %s215 = sadd.s32 %s213, %s214
      %s216 = smul.addr %s215, 2
      %s217 = scalar_lea.vmem %s2, %s216
      %s218 = sadd.s32 %s19, %s20
      %p219 = scmp.lt.s32.totalorder %s218, 0
      %s220 = scalar_select %p219, %s218, 0
      %p221 = scmp.lt.s32.totalorder %s18, 1
      %s222 = scalar_select %p221, %s18, 1
      %p223 = scmp.lt.s32.totalorder %s220, 0
      %s224 = scalar_select %p223, %s220, 0
      %s225 = smul.addr %s222, 4
      %s226 = sadd.s32 %s224, %s225
      %s227 = smul.addr %s226, 2
      %s228 = scalar_lea.vmem %s0, %s227
      %s229 = sadd.s32 %s19, %s20
      %p230 = scmp.lt.s32.totalorder %s229, 0
      %s231 = scalar_select %p230, %s229, 0
      %s232 = sadd.s32 %s19, %s20
      %p233 = scmp.lt.s32.totalorder %s232, 0
      %s234 = scalar_select %p233, %s232, 0
      %p235 = scmp.lt.s32.totalorder %s18, 1
      %s236 = scalar_select %p235, %s18, 1
      %p237 = scmp.lt.s32.totalorder %s234, 0
      %s238 = scalar_select %p237, %s234, 0
      %s239 = sadd.s32 %s238, %s236
      %s240 = smul.addr %s239, 2
      %s241 = scalar_lea.vmem %s1, %s240
      %s242 = sadd.s32 %s19, %s20
      %p243 = scmp.lt.s32.totalorder %s242, 0
      %s244 = scalar_select %p243, %s242, 0
      %p245 = scmp.lt.s32.totalorder %s18, 1
      %s246 = scalar_select %p245, %s18, 1
      %p247 = scmp.lt.s32.totalorder %s19, 0
      %s248 = scalar_select %p247, %s19, 0
      %s249 = smul.addr %s248, 9
      %s250 = smul.addr %s246, 9
      %s251 = sadd.s32 %s249, %s250
      %s252 = smul.addr %s251, 2
      %s253 = scalar_lea.vmem %s2, %s252
      %p254 = scmp.eq.s32.totalorder %s20, 0
      // Predicated region
      $region29: #{tversky_index.1} parent=27 // pred_check
        %p255 = pneg %p254
      $region30: #{tversky_index.1} parent=27 // pred_check_branch
        %257 = sbr.rel (%p255) target = $region32
      $region31: #{tversky_index.1} parent=27 // pred_region
        %258 = vst [vmem:[%s253] sm:$0x3] 0
        %259 = vst [vmem:[%s253 + $0x2] sm:$0x3] 0
        %260 = vst [vmem:[%s253 + $0x4] sm:$0x3] 0
        %261 = vst [vmem:[%s253 + $0x6] sm:$0x3] 0
        %262 = vst [vmem:[%s253 + $0x8] sm:$0x3] 0
        %263 = vst [vmem:[%s253 + $0xa] sm:$0x3] 0
        %264 = vst [vmem:[%s253 + $0xc] sm:$0x3] 0
        %265 = vst [vmem:[%s253 + $0xe] sm:$0x3] 0
        %266 = vst [vmem:[%s253 + $0x10] sm:$0x3] 0
      $region32: #{tversky_index.1} parent=27 // pred_fallthru
        _
      %v267 = vld [vmem:[%s241] sm:$0x3]
      %v268 = vld [vmem:[%s228] sm:$0x3]
      %s269 = sadd.s32 0, 2
      %s270 = scalar_lea.vmem %s228, %s269
      %v271 = vld [vmem:[%s270] sm:$0x3]
      %vm272 = vcmp.gt.f32.partialorder %v271, %v268
      %v273 = vmax.f32 %v268, %v271
      %s274 = sadd.s32 0, 4
      %s275 = scalar_lea.vmem %s228, %s274
      %v276 = vld [vmem:[%s275] sm:$0x3]
      %vm277 = vcmp.gt.f32.partialorder %v276, %v273
      %v278 = vmax.f32 %v273, %v276
      %s279 = sadd.s32 0, 6
      %s280 = scalar_lea.vmem %s228, %s279
      %v281 = vld [vmem:[%s280] sm:$0x3]
      %vm282 = vcmp.gt.f32.partialorder %v281, %v278
      %vm283 = vmxor %vm282, 1
      %vm284 = vmand %vm277, %vm283
      %vm285 = vmor %vm282, %vm277
      %vm286 = vmxor %vm285, 1
      %vm287 = vmand %vm272, %vm286
      %vm288 = vcmp.eq.s32.totalorder %v267, 1
      %v289 = vld [vmem:[%s253] sm:$0x3]
      %vm290 = vmand %vm287, %vm288
      %v291 = vsel %vm290, 1, 0
      %v292 = vadd.s32 %v289, %v291
      %293 = vst [vmem:[%s253] sm:$0x3] %v292
      %s294 = scalar_lea.vmem %s253, 2
      %v295 = vld [vmem:[%s294] sm:$0x3]
      %v296 = vsel %vm287, 1, 0
      %v297 = vadd.s32 %v295, %v296
      %298 = vst [vmem:[%s294] sm:$0x3] %v297
      %s299 = scalar_lea.vmem %s253, 4
      %v300 = vld [vmem:[%s299] sm:$0x3]
      %v301 = vsel %vm288, 1, 0
      %v302 = vadd.s32 %v300, %v301
      %303 = vst [vmem:[%s299] sm:$0x3] %v302
      %vm304 = vcmp.eq.s32.totalorder %v267, 2
      %s305 = scalar_lea.vmem %s253, 6
      %v306 = vld [vmem:[%s305] sm:$0x3]
      %vm307 = vmand %vm284, %vm304
      %v308 = vsel %vm307, 1, 0
      %v309 = vadd.s32 %v306, %v308
      %310 = vst [vmem:[%s305] sm:$0x3] %v309
      %s311 = scalar_lea.vmem %s253, 8
      %v312 = vld [vmem:[%s311] sm:$0x3]
      %v313 = vsel %vm284, 1, 0
      %v314 = vadd.s32 %v312, %v313
      %315 = vst [vmem:[%s311] sm:$0x3] %v314
      %s316 = scalar_lea.vmem %s253, 10
      %v317 = vld [vmem:[%s316] sm:$0x3]
      %v318 = vsel %vm304, 1, 0
      %v319 = vadd.s32 %v317, %v318
      %320 = vst [vmem:[%s316] sm:$0x3] %v319
      %vm321 = vcmp.eq.s32.totalorder %v267, 3
      %s322 = scalar_lea.vmem %s253, 12
      %v323 = vld [vmem:[%s322] sm:$0x3]
      %vm324 = vmand %vm282, %vm321
      %v325 = vsel %vm324, 1, 0
      %v326 = vadd.s32 %v323, %v325
      %327 = vst [vmem:[%s322] sm:$0x3] %v326
      %s328 = scalar_lea.vmem %s253, 14
      %v329 = vld [vmem:[%s328] sm:$0x3]
      %v330 = vsel %vm282, 1, 0
      %v331 = vadd.s32 %v329, %v330
      %332 = vst [vmem:[%s328] sm:$0x3] %v331
      %s333 = scalar_lea.vmem %s253, 16
      %v334 = vld [vmem:[%s333] sm:$0x3]
      %v335 = vsel %vm321, 1, 0
      %v336 = vadd.s32 %v334, %v335
      %337 = vst [vmem:[%s333] sm:$0x3] %v336
      %p338 = scmp.lt.s32.totalorder %s18, 1
      %s339 = scalar_select %p338, %s18, 1
      %p340 = scmp.lt.s32.totalorder %s19, 0
      %s341 = scalar_select %p340, %s19, 0
      %s342 = smul.addr %s341, 9
      %s343 = smul.addr %s339, 9
      %s344 = sadd.s32 %s342, %s343
      %s345 = smul.addr %s344, 2
      %s346 = scalar_lea.vmem %s2, %s345
      // Predicated region
      $region33: #{tversky_index.1} parent=27 // pred_check
        %p347 = pneg %p120
      $region34: #{tversky_index.1} parent=27 // pred_check_branch
        %349 = sbr.rel (%p347) target = $region36
      $region35: #{tversky_index.1} parent=27 // pred_region
        _
      $region36: #{tversky_index.1} parent=27 // pred_fallthru
        _
    $region28: #{tversky_index.1} parent=5 // pred_fallthru
      _
    %p350 = scmp.le.s32.totalorder 2, %s8
    // Predicated region
    $region37: #{tversky_index.1} parent=5 // pred_check
      %p351 = pneg %p350
    $region38: #{tversky_index.1} parent=5 // pred_check_branch
      %353 = sbr.rel (%p351) target = $region40
    $region39: #{tversky_index.1} parent=5 // pred_region
      %s354 = ssub.s32 %s8, 2
      // Predicated region
      $region41: #{tversky_index.1} parent=39 // pred_check
        %p355 = pneg %p126
      $region42: #{tversky_index.1} parent=39 // pred_check_branch
        %357 = sbr.rel (%p355) target = $region44
      $region43: #{tversky_index.1} parent=39 // pred_region
        %p358 = scmp.lt.s32.totalorder %s21, 1
        %s359 = scalar_select %p358, %s21, 1
        %p360 = scmp.lt.s32.totalorder %s22, 0
        %s361 = scalar_select %p360, %s22, 0
        %s362 = smul.addr %s361, 9
        %s363 = smul.addr %s359, 9
        %s364 = sadd.s32 %s362, %s363
        %s365 = smul.addr %s364, 2
        %s366 = scalar_lea.vmem %s2, %s365
      $region44: #{tversky_index.1} parent=39 // pred_fallthru
        _
    $region40: #{tversky_index.1} parent=5 // pred_fallthru
      _
  $region6: #{tversky_index.1} parent=0 // loop_footer
    %s12 = sadd.s32 1, %s8
  $region7: #{tversky_index.1} parent=0 // loop_footer_branch
    %7 = sbr.rel target = $region3
  $region8: #{tversky_index.1} parent=0 // loop_exit
    _

</llo_original>
